<compile_context>
chip_gen: v7x
topology: tpu7x:2x2x1
jax: 0.10.0
libtpu: 0.0.40
codegen_flags: <defaults>
</compile_context>

<pallas_src>
import functools

import numpy as np

import jax
import jax.numpy as jnp
from jax.experimental import pallas as pl
from jax.experimental.pallas import tpu as pltpu


# ----------------------------- Pallas kernels --------------------------------
def _resize_rows_first_kernel(wh_ref, wwt_ref, x_ref, o_ref):
    # wh_ref : (tm, Hi)      bf16 row-interpolation weights (one row tile)
    # wwt_ref: (Wi, Wo_pad)  bf16 column-interpolation weights (pre-transposed)
    # x_ref  : (Hi, Wi)      f32 one channel (channel dim squeezed); cast here
    # o_ref  : (tm, Wo_pad)  f32
    x_bf16 = x_ref[...].astype(jnp.bfloat16)
    tmp = jnp.dot(wh_ref[...], x_bf16, preferred_element_type=jnp.float32)
    o_ref[...] = jnp.dot(tmp.astype(jnp.bfloat16), wwt_ref[...],
                         preferred_element_type=jnp.float32)


def _resize_cols_first_kernel(wh_ref, wwt_ref, x_ref, o_ref):
    # wh_ref : (Ho_pad, Hi)  bf16
    # wwt_ref: (Wi, tn)      bf16 (one column tile)
    # x_ref  : (Hi, Wi)      f32 (channel dim squeezed); cast here
    # o_ref  : (Ho_pad, tn)  f32
    x_bf16 = x_ref[...].astype(jnp.bfloat16)
    tmp = jnp.dot(x_bf16, wwt_ref[...], preferred_element_type=jnp.float32)
    o_ref[...] = jnp.dot(wh_ref[...], tmp.astype(jnp.bfloat16),
                         preferred_element_type=jnp.float32)


# --------------------- interpolation weights (host-side glue) ----------------
def _round_up(x: int, m: int) -> int:
    return ((x + m - 1) // m) * m


def _bilinear_weights_np(out_size: int, in_size: int, out_pad: int | None = None):
    """PyTorch bilinear, align_corners=False, no antialias. Rows beyond
    out_size (padding) are all-zero."""
    if out_pad is None:
        out_pad = out_size
    scale = in_size / out_size
    d = (np.arange(out_size, dtype=np.float64) + 0.5) * scale - 0.5
    d = np.clip(d, 0.0, float(in_size - 1))
    lo = np.floor(d).astype(np.int64)
    hi = np.minimum(lo + 1, in_size - 1)
    frac = (d - lo).astype(np.float32)
    w = np.zeros((out_pad, in_size), np.float32)
    rows = np.arange(out_size)
    w[rows, lo] += (1.0 - frac)
    w[rows, hi] += frac
    return w


def _nearest_indices_np(out_size: int, in_size: int):
    """PyTorch 'nearest' mode: src = floor(dst * in/out)."""
    idx = np.floor(np.arange(out_size, dtype=np.float64)
                   * (in_size / out_size)).astype(np.int32)
    return np.minimum(idx, in_size - 1)


def _torchvision_output_size(h: int, w: int, size: int):
    """torchvision F.resize with an int / 1-tuple: smaller edge -> size, keep AR."""
    if w <= h:
        new_w = size
        new_h = int(size * h / w)
    else:
        new_h = size
        new_w = int(size * w / h)
    return new_h, new_w


# ---------------------- cached, compiled image-resize builder ----------------
_ROW_TILE = 256   # multiple of 16 (sublane-friendly for bf16/f32)
_COL_TILE = 512   # multiple of 128 (lane-dense)


@functools.lru_cache(maxsize=None)
def _build_image_resize(c: int, hi: int, wi: int, ho: int, wo: int):
    """Returns a jitted callable image(C,Hi,Wi) f32 -> resized image(C,Ho,Wo) f32."""
    ho_pad = _round_up(ho, 16)    # sublane-friendly output rows
    wo_pad = _round_up(wo, 128)   # lane-dense output stores

    # Choose the cheaper matmul order from static shapes.
    cost_rows_first = ho * wi * (hi + wo)    # (Wh@x)@WwT
    cost_cols_first = hi * wo * (wi + ho)    # Wh@(x@WwT)
    rows_first = cost_rows_first <= cost_cols_first

    if rows_first:
        tm = ho_pad if ho_pad <= _ROW_TILE else _ROW_TILE
        ho_pad = _round_up(ho_pad, tm)
        grid = (c, ho_pad // tm)
        kernel = _resize_rows_first_kernel
        in_specs = [
            pl.BlockSpec((tm, hi), lambda cc, r: (r, 0)),
            pl.BlockSpec((wi, wo_pad), lambda cc, r: (0, 0)),
            pl.BlockSpec((pl.Squeezed(), hi, wi), lambda cc, r: (cc, 0, 0)),
        ]
        out_spec = pl.BlockSpec((pl.Squeezed(), tm, wo_pad),
                                lambda cc, r: (cc, r, 0))
    else:
        tn = wo_pad if wo_pad <= _COL_TILE else _COL_TILE
        wo_pad = _round_up(wo_pad, tn)
        grid = (c, wo_pad // tn)
        kernel = _resize_cols_first_kernel
        in_specs = [
            pl.BlockSpec((ho_pad, hi), lambda cc, j: (0, 0)),
            pl.BlockSpec((wi, tn), lambda cc, j: (0, j)),
            pl.BlockSpec((pl.Squeezed(), hi, wi), lambda cc, j: (cc, 0, 0)),
        ]
        out_spec = pl.BlockSpec((pl.Squeezed(), ho_pad, tn),
                                lambda cc, j: (cc, 0, j))

    # Zero-padded interpolation weights, bf16 at the kernel boundary (tiny,
    # built once per cached shape; captured as jit constants).
    wh = jnp.asarray(_bilinear_weights_np(ho, hi, ho_pad), dtype=jnp.bfloat16)
    wwt = jnp.asarray(_bilinear_weights_np(wo, wi, wo_pad).T,
                      dtype=jnp.bfloat16)                      # (Wi, Wo_pad)

    resize_call = pl.pallas_call(
        kernel,
        out_shape=jax.ShapeDtypeStruct((c, ho_pad, wo_pad), jnp.float32),
        grid=grid,
        in_specs=in_specs,
        out_specs=out_spec,
        compiler_params=pltpu.CompilerParams(
            dimension_semantics=("parallel", "parallel"),
            vmem_limit_bytes=48 * 1024 * 1024,
        ),
    )

    def fn(image):
        out = resize_call(wh, wwt, image)          # image stays f32; cast in-kernel
        return out[:, :ho, :wo].astype(image.dtype)

    return jax.jit(fn)


def _nearest_resize_target(target, ho: int, wo: int):
    """Exact nearest-neighbor resize for integer labels: a pure gather."""
    hi, wi = target.shape[-2], target.shape[-1]
    row_idx = jnp.asarray(_nearest_indices_np(ho, hi))
    col_idx = jnp.asarray(_nearest_indices_np(wo, wi))
    out = jnp.take(target, row_idx, axis=1)
    out = jnp.take(out, col_idx, axis=2)
    return out


# ------------------------------- module -------------------------------------
class RandomResize:
    """JAX/Pallas port of the PyTorch RandomResize segmentation transform."""

    def __init__(self, min_size: int, max_size: int | None = None):
        self.min_size = min_size
        self.max_size = min_size if max_size is None else max_size

    def __call__(self, image_and_target, key):
        image, target = image_and_target   # image (C,H,W) f32, target (Ct,H,W) i32
        c, h, w = image.shape

        # Host-side size draw: Pallas output shapes must be static. Compiled
        # resize callables are cached per (shape, size), so at most
        # (max_size - min_size + 1) distinct compiles ever happen.
        size = int(jax.random.randint(key, (), self.min_size, self.max_size + 1))
        ho, wo = _torchvision_output_size(h, w, size)

        # Image: bilinear (legacy torchvision tensor behavior, antialias off).
        image_out = _build_image_resize(c, h, w, ho, wo)(image)

        # Target: nearest-neighbor — exact integer gather, no kernel needed.
        target_out = _nearest_resize_target(target, ho, wo)
        return image_out, target_out


# --------------------------------- main --------------------------------------
if __name__ == "__main__":
    key = jax.random.PRNGKey(0)
    k_img, k_tgt, k_size = jax.random.split(key, 3)

    C, H, W = 4, 16, 16
    image = jax.random.normal(k_img, (C, H, W), dtype=jnp.float32)
    target = jax.random.randint(k_tgt, (1, H, W), 0, 5, dtype=jnp.int32)

    transform = RandomResize(min_size=12, max_size=20)
    img_out, tgt_out = transform((image, target), k_size)

    jax.block_until_ready(img_out)
    jax.block_until_ready(tgt_out)

    assert img_out.ndim == 3 and img_out.shape[0] == C
    assert tgt_out.shape[1:] == img_out.shape[1:]
    assert tgt_out.dtype == jnp.int32

    # Numerical sanity vs. an exact (f64) separable bilinear reference.
    ho, wo = img_out.shape[1], img_out.shape[2]
    wh_ref = _bilinear_weights_np(ho, H).astype(np.float64)
    ww_ref = _bilinear_weights_np(wo, W).astype(np.float64)
    ref = np.einsum("oh,chw,pw->cop", wh_ref,
                    np.asarray(image, dtype=np.float64), ww_ref)
    np.testing.assert_allclose(np.asarray(img_out, dtype=np.float64),
                               ref, atol=0.1)

    # Nearest target check (exact).
    r_idx = _nearest_indices_np(ho, H)
    c_idx = _nearest_indices_np(wo, W)
    tgt_ref = np.asarray(target)[:, r_idx][:, :, c_idx]
    assert np.array_equal(np.asarray(tgt_out), tgt_ref)

    print("KERNEL_OK")
</pallas_src>

<mosaic_0001>
module attributes {stable_mosaic.version = 11 : i64} {
  func.func @_resize_rows_first_kernel(%arg0: i32, %arg1: i32, %arg2: memref<16x16xbf16, #tpu.memory_space<vmem>>, %arg3: memref<16x128xbf16, #tpu.memory_space<vmem>>, %arg4: memref<1x16x16xf32, #tpu.memory_space<vmem>>, %arg5: memref<1x16x128xf32, #tpu.memory_space<vmem>>) attributes {dimension_semantics = [#tpu.dimension_semantics<parallel>, #tpu.dimension_semantics<parallel>], iteration_bounds = array<i64: 4, 1>, scalar_prefetch = 0 : i64, scratch_operands = 0 : i64, tpu.core_type = #tpu.core_type<tc>, window_params = [{transform_indices = @transform_0, window_bounds = array<i64: 16, 16>}, {pipeline_mode = #tpu.pipeline_mode<synchronous>, transform_indices = @transform_1, window_bounds = array<i64: 16, 128>}, {transform_indices = @transform_2, window_bounds = array<i64: 1, 16, 16>}, {transform_indices = @transform_3, window_bounds = array<i64: 1, 16, 128>}]} {
    %c0 = arith.constant 0 : index
    %c0_0 = arith.constant 0 : index
    %c0_1 = arith.constant 0 : index
    %0 = vector.load %arg4[%c0, %c0_0, %c0_1] : memref<1x16x16xf32, #tpu.memory_space<vmem>>, vector<1x16x16xf32>
    %1 = vector.shape_cast %0 : vector<1x16x16xf32> to vector<16x16xf32>
    %2 = arith.truncf %1 : vector<16x16xf32> to vector<16x16xbf16>
    %c0_2 = arith.constant 0 : index
    %c0_3 = arith.constant 0 : index
    %3 = vector.load %arg2[%c0_2, %c0_3] : memref<16x16xbf16, #tpu.memory_space<vmem>>, vector<16x16xbf16>
    %cst = arith.constant dense<0.000000e+00> : vector<16x16xf32>
    %4 = tpu.matmul %3, %2, %cst {dimension_numbers = #tpu.dot_dimension_numbers<[1], [0], [0], [1], [0, 0, 1, 1], [], []>} : vector<16x16xbf16>, vector<16x16xbf16>, vector<16x16xf32> -> vector<16x16xf32>
    %5 = arith.truncf %4 : vector<16x16xf32> to vector<16x16xbf16>
    %c0_4 = arith.constant 0 : index
    %c0_5 = arith.constant 0 : index
    %6 = vector.load %arg3[%c0_4, %c0_5] : memref<16x128xbf16, #tpu.memory_space<vmem>>, vector<16x128xbf16>
    %cst_6 = arith.constant dense<0.000000e+00> : vector<16x128xf32>
    %7 = tpu.matmul %5, %6, %cst_6 {dimension_numbers = #tpu.dot_dimension_numbers<[1], [0], [0], [1], [0, 0, 1, 1], [], []>} : vector<16x16xbf16>, vector<16x128xbf16>, vector<16x128xf32> -> vector<16x128xf32>
    %c0_7 = arith.constant 0 : index
    %c0_8 = arith.constant 0 : index
    %c0_9 = arith.constant 0 : index
    %8 = vector.load %arg5[%c0_7, %c0_8, %c0_9] : memref<1x16x128xf32, #tpu.memory_space<vmem>>, vector<1x16x128xf32>
    %9 = vector.shape_cast %8 : vector<1x16x128xf32> to vector<16x128xf32>
    %10 = vector.shape_cast %7 : vector<16x128xf32> to vector<1x16x128xf32>
    tpu.vector_store %arg5[%c0_7, %c0_8, %c0_9], %10 {strides = array<i32>} : memref<1x16x128xf32, #tpu.memory_space<vmem>>, vector<1x16x128xf32>,
    return
  }
  func.func @transform_0(%arg0: i32, %arg1: i32) -> (i32, i32) {
    %c0_i32 = arith.constant 0 : i32
    %c0_i32_0 = arith.constant 0 : i32
    return %arg1, %c0_i32 : i32, i32
  }
  func.func @transform_1(%arg0: i32, %arg1: i32) -> (i32, i32) {
    %c0_i32 = arith.constant 0 : i32
    %c0_i32_0 = arith.constant 0 : i32
    %c0_i32_1 = arith.constant 0 : i32
    return %c0_i32, %c0_i32_0 : i32, i32
  }
  func.func @transform_2(%arg0: i32, %arg1: i32) -> (i32, i32, i32) {
    %c0_i32 = arith.constant 0 : i32
    %c0_i32_0 = arith.constant 0 : i32
    %c0_i32_1 = arith.constant 0 : i32
    return %arg0, %c0_i32, %c0_i32_0 : i32, i32, i32
  }
  func.func @transform_3(%arg0: i32, %arg1: i32) -> (i32, i32, i32) {
    %c0_i32 = arith.constant 0 : i32
    %c0_i32_0 = arith.constant 0 : i32
    return %arg0, %arg1, %c0_i32 : i32, i32, i32
  }
}

</mosaic_0001>

<llo_original>
// kernel: fn.1
$region0: #{fn.1}
  #allocation0 [shape = 'u32[]', space=smem, size = 0x4, offset = 0x4, fixed_abs, tag = 'smem constant byte address 0x4 - core index']
  #allocation1 [shape = 'u32[144,128]{1,0:T(1,128)}', space=vmem, size = 0x12000, scoped, tag = 'internal scratch']
  %s0 = inlined_call_operand.hbm [shape: bf16[16,16], index: 0, kind: input, shape index: {}]
  %s1 = inlined_call_operand.vmem [shape: bf16[16,128], index: 1, kind: input, shape index: {}]
  %s2 = inlined_call_operand.hbm [shape: f32[4,16,16], index: 2, kind: input, shape index: {}]
  %s3 = inlined_call_operand.vmem [shape: f32[4,16,128], index: 3, kind: output, shape index: {}]
  %s4 = sld [smem:[#allocation0]]
  $region53: #{fn.1} parent=0
    _
  %s6 = ssub.s32 1, %s4
  %s7 = scalar_select 0, %s6, %s4
  $region1: #{fn.1} parent=0
    #allocation2 [shape = 'u8[4096]{0}', space=vmem, size = 0x1000, scoped, tag = 'input window, operand 0, single buffered']
    #allocation3 [shape = 's32[2]{0}', space=sflag, size = 0x8, scoped, tag = 'scoped memory for fn.1']
    #allocation4 [shape = 'u8[16384]{0}', space=vmem, size = 0x4000, scoped, tag = 'input window, operand 2']
    #allocation5 [shape = 's32[2]{0}', space=sflag, size = 0x8, scoped, tag = 'scoped memory for fn.1']
    %8 = vsyncpa [#allocation3], 0
    %9 = vsyncpa [#allocation5], 0
    %s10 = scalar_lea.sflag [#allocation5], 1
    %11 = vsyncpa %s10, 0
    loop: start=0, step=1, limit=6
    $region2: #{fn.1} parent=1 // loop_pre_header
      _
    $region3: #{fn.1} parent=1 // loop_header
      %s13 = sphi 0, %s17
      %p14 = scmp.ge.s32.totalorder %s13, 6
      %s20 = sphi 0, %s32
      %s21 = sphi 0, %s28
      %s22 = sphi 0, %s20
      %s23 = sphi 0, %s21
      %s24 = sphi 0, %s22
      %s25 = sphi 0, %s23
      %s35 = sphi 0, %s37
      %s38 = sphi 0, %s35
      %s39 = sphi 0, %s38
      %s55 = sphi 0, %s39
      %s59 = sphi 0, %s59
      %s61 = sphi 0, %s59
      %s62 = sphi 0, %s61
      %s76 = sphi 0, %s62
      %s82 = sphi 0, %s84
      %s85 = sphi 0, %s82
      %s86 = sphi 0, %s85
      %s102 = sphi 0, %s86
      %s110 = sphi 0, %s112
      %s113 = sphi 0, %s110
      %s114 = sphi 0, %s113
      %s130 = sphi 0, %s114
    $region4: #{fn.1} parent=1 // loop_header_branch
      %16 = sbr.rel (%p14) target = $region8
    $region5: #{fn.1} parent=1 // loop_body
      %s18 = ssub.s32 %s13, 1
      %s19 = ssub.s32 %s13, 2
      %s26 = sadd.s32 1, %s21
      %p27 = scmp.ge.s32.totalorder %s26, 1
      %s28 = scalar_select %p27, 0, %s26
      %s29 = sadd.s32 1, %s20
      %s30 = scalar_select %p27, %s29, %s20
      %p31 = scmp.ge.s32.totalorder %s30, 4
      %s32 = scalar_select %p31, 0, %s30
      %s33 = ssub.s32 %s21, %s28
      %p34 = scmp.eq.s32.totalorder %s33, 0
      %s36 = sadd.s32 %s35, 1
      %s37 = scalar_select %p34, %s35, %s36
      %p40 = pneg %p34
      %p41 = scmp.eq.s32.totalorder %s13, 3
      %p42 = por %p40, %p41
      %p43 = scmp.ne.s32.totalorder %s35, %s38
      %p44 = scmp.eq.s32.totalorder %s13, 0
      %p45 = por %p43, %p44
      %p46 = scmp.ne.s32.totalorder %s35, %s38
      %p47 = scmp.eq.s32.totalorder %s18, 3
      %p48 = por %p46, %p47
      %p49 = scmp.ne.s32.totalorder %s38, %s39
      %p50 = scmp.eq.s32.totalorder %s18, 0
      %p51 = por %p49, %p50
      %p52 = scmp.ne.s32.totalorder %s38, %s39
      %p53 = scmp.eq.s32.totalorder %s19, 3
      %p54 = por %p52, %p53
      %p56 = scmp.ne.s32.totalorder %s39, %s55
      %p57 = scmp.eq.s32.totalorder %s19, 0
      %p58 = por %p56, %p57
      %s60 = sadd.s32 %s59, 1
      %p63 = scmp.eq.s32.totalorder %s13, 3
      %p64 = scmp.ne.s32.totalorder %s59, %s61
      %p65 = scmp.eq.s32.totalorder %s13, 0
      %p66 = por %p64, %p65
      %p67 = scmp.ne.s32.totalorder %s59, %s61
      %p68 = scmp.eq.s32.totalorder %s18, 3
      %p69 = por %p67, %p68
      %p70 = scmp.ne.s32.totalorder %s61, %s62
      %p71 = scmp.eq.s32.totalorder %s18, 0
      %p72 = por %p70, %p71
      %p73 = scmp.ne.s32.totalorder %s61, %s62
      %p74 = scmp.eq.s32.totalorder %s19, 3
      %p75 = por %p73, %p74
      %p77 = scmp.ne.s32.totalorder %s62, %s76
      %p78 = scmp.eq.s32.totalorder %s19, 0
      %p79 = por %p77, %p78
      %s80 = ssub.s32 %s20, %s32
      %p81 = scmp.eq.s32.totalorder %s80, 0
      %s83 = sadd.s32 %s82, 1
      %s84 = scalar_select %p81, %s82, %s83
      %p87 = pneg %p81
      %p88 = scmp.eq.s32.totalorder %s13, 3
      %p89 = por %p87, %p88
      %p90 = scmp.ne.s32.totalorder %s82, %s85
      %p91 = scmp.eq.s32.totalorder %s13, 0
      %p92 = por %p90, %p91
      %p93 = scmp.ne.s32.totalorder %s82, %s85
      %p94 = scmp.eq.s32.totalorder %s18, 3
      %p95 = por %p93, %p94
      %p96 = scmp.ne.s32.totalorder %s85, %s86
      %p97 = scmp.eq.s32.totalorder %s18, 0
      %p98 = por %p96, %p97
      %p99 = scmp.ne.s32.totalorder %s85, %s86
      %p100 = scmp.eq.s32.totalorder %s19, 3
      %p101 = por %p99, %p100
      %p103 = scmp.ne.s32.totalorder %s86, %s102
      %p104 = scmp.eq.s32.totalorder %s19, 0
      %p105 = por %p103, %p104
      %s106 = ssub.s32 %s20, %s32
      %s107 = ssub.s32 %s21, %s28
      %s108 = sor.u32 %s106, %s107
      %p109 = scmp.eq.s32.totalorder %s108, 0
      %s111 = sadd.s32 %s110, 1
      %s112 = scalar_select %p109, %s110, %s111
      %p115 = pneg %p109
      %p116 = scmp.eq.s32.totalorder %s13, 3
      %p117 = por %p115, %p116
      %p118 = scmp.ne.s32.totalorder %s110, %s113
      %p119 = scmp.eq.s32.totalorder %s13, 0
      %p120 = por %p118, %p119
      %p121 = scmp.ne.s32.totalorder %s110, %s113
      %p122 = scmp.eq.s32.totalorder %s18, 3
      %p123 = por %p121, %p122
      %p124 = scmp.ne.s32.totalorder %s113, %s114
      %p125 = scmp.eq.s32.totalorder %s18, 0
      %p126 = por %p124, %p125
      %p127 = scmp.ne.s32.totalorder %s113, %s114
      %p128 = scmp.eq.s32.totalorder %s19, 3
      %p129 = por %p127, %p128
      %p131 = scmp.ne.s32.totalorder %s114, %s130
      %p132 = scmp.eq.s32.totalorder %s19, 0
      %p133 = por %p131, %p132
      %p134 = scmp.le.s32.totalorder 1, %s13
      %p135 = scmp.lt.s32.totalorder %s13, 5
      %p136 = pnand %p134, %p135
      %p137 = pneg %p136
      // Predicated region
      $region9: #{fn.1} parent=5 // pred_check
        _
      $region10: #{fn.1} parent=5 // pred_check_branch
        %139 = sbr.rel (%p136) target = $region12
      $region11: #{fn.1} parent=5 // pred_region
        %s140 = ssub.s32 %s13, 1
        // Predicated region
        $region13: #{fn.1} parent=11 // pred_check
          %p141 = pneg %p51
        $region14: #{fn.1} parent=11 // pred_check_branch
          %143 = sbr.rel (%p141) target = $region16
        $region15: #{fn.1} parent=11 // pred_region
          %s144 = smul.u32 2, %s23
          %s146 = ssub.s32 128, 128
          %147 = vsyncadd [#allocation3], %s146
          %s148 = smul.addr %s144, 64
          %s149 = scalar_lea.hbm %s0, %s148
          %s150 = sshll.u32 [#allocation2], 4
          %s151 = int_to_ptr.vmem [resolvable:$true] %s150
          %156 = dma.hbm_to_vmem [thread:$0]  %s149, 128, %s151, [#allocation3], 64, 64, 4
        $region16: #{fn.1} parent=11 // pred_fallthru
          _
        // Predicated region
        $region17: #{fn.1} parent=11 // pred_check
          %p157 = pneg %p72
        $region18: #{fn.1} parent=11 // pred_check_branch
          %159 = sbr.rel (%p157) target = $region20
        $region19: #{fn.1} parent=11 // pred_region
          _
        $region20: #{fn.1} parent=11 // pred_fallthru
          _
      $region12: #{fn.1} parent=5 // pred_fallthru
        _
      %p160 = scmp.lt.s32.totalorder %s13, 4
      // Predicated region
      $region21: #{fn.1} parent=5 // pred_check
        %p161 = pneg %p160
      $region22: #{fn.1} parent=5 // pred_check_branch
        %163 = sbr.rel (%p161) target = $region24
      $region23: #{fn.1} parent=5 // pred_region
        // Predicated region
        $region25: #{fn.1} parent=23 // pred_check
          %p164 = pneg %p92
        $region26: #{fn.1} parent=23 // pred_check_branch
          %166 = sbr.rel (%p164) target = $region28
        $region27: #{fn.1} parent=23 // pred_region
          %s167 = sand.u32 %s82, 1
          %s168 = scalar_lea.sflag [#allocation5], %s167
          %s169 = sand.u32 %s82, 1
          %s170 = smul.addr %s169, 16
          %s171 = scalar_lea.vmem [#allocation4], %s170
          %s173 = ssub.s32 256, 256
          %174 = vsyncadd %s168, %s173
          %s175 = smul.addr %s20, 2
          %s176 = smul.addr %s175, 128
          %s177 = scalar_lea.hbm %s2, %s176
          %s178 = sshll.u32 %s171, 4
          %s179 = int_to_ptr.vmem [resolvable:$true] %s178
          %184 = dma.hbm_to_vmem [thread:$0]  %s177, 256, %s179, %s168, 128, 128, 8
        $region28: #{fn.1} parent=23 // pred_fallthru
          _
      $region24: #{fn.1} parent=5 // pred_fallthru
        _
      %p185 = scmp.le.s32.totalorder 1, %s13
      %p186 = scmp.lt.s32.totalorder %s13, 5
      %p187 = pnand %p185, %p186
      %p188 = pneg %p187
      // Predicated region
      $region29: #{fn.1} parent=5 // pred_check
        _
      $region30: #{fn.1} parent=5 // pred_check_branch
        %190 = sbr.rel (%p187) target = $region32
      $region31: #{fn.1} parent=5 // pred_region
        %s191 = ssub.s32 %s13, 1
        // Predicated region
        $region33: #{fn.1} parent=31 // pred_check
          %p192 = pneg %p51
        $region34: #{fn.1} parent=31 // pred_check_branch
          %194 = sbr.rel (%p192) target = $region36
        $region35: #{fn.1} parent=31 // pred_region
          %195 = dma.done [#allocation3], 128
        $region36: #{fn.1} parent=31 // pred_fallthru
          _
        %s196 = sand.u32 %s85, 1
        %s197 = scalar_lea.sflag [#allocation5], %s196
        %s198 = sand.u32 %s85, 1
        %s199 = smul.addr %s198, 16
        %s200 = scalar_lea.vmem [#allocation4], %s199
        // Predicated region
        $region37: #{fn.1} parent=31 // pred_check
          %p201 = pneg %p98
        $region38: #{fn.1} parent=31 // pred_check_branch
          %203 = sbr.rel (%p201) target = $region40
        $region39: #{fn.1} parent=31 // pred_region
          %204 = dma.done %s197, 256
        $region40: #{fn.1} parent=31 // pred_fallthru
          _
        %p205 = pneg %p51
        %p206 = pneg %p48
        %p207 = pneg %p72
        %p208 = pneg %p69
        %s209 = sand.u32 %s85, 1
        %s210 = scalar_lea.sflag [#allocation5], %s209
        %s211 = sand.u32 %s85, 1
        %s212 = smul.addr %s211, 16
        %s213 = scalar_lea.vmem [#allocation4], %s212
        %p214 = pneg %p98
        %p215 = pneg %p95
        %p216 = pneg %p126
        %p217 = pneg %p123
        %s218 = smul.u32 2, %s23
        %p219 = scmp.lt.s32.totalorder %s22, 3
        %s220 = scalar_select %p219, %s22, 3
        %p221 = scmp.lt.s32.totalorder %s218, 1
        %s222 = scalar_select %p221, %s218, 1
        %s223 = smul.addr %s220, 2
        %s224 = sadd.s32 %s222, %s223
        %s225 = smul.addr %s224, 8
        %s226 = scalar_lea.vmem %s3, %s225
        %s227 = smul.u32 2, %s23
        %s228 = smul.u32 2, %s23
        %p229 = scmp.lt.s32.totalorder %s22, 3
        %s230 = scalar_select %p229, %s22, 3
        %p231 = scmp.lt.s32.totalorder %s228, 1
        %s232 = scalar_select %p231, %s228, 1
        %s233 = smul.addr %s230, 2
        %s234 = sadd.s32 %s232, %s233
        %s235 = smul.addr %s234, 8
        %s236 = scalar_lea.vmem %s3, %s235
        %s237 = smul.u32 2, %s23
        %v239 = vld [vmem:[%s200] sm:$0xff]
        %v240 = vld [vmem:[%s200 + $0x8] sm:$0xff]
        %v241 = vpack.c.bf16 %v240, %v239
        %v242 = vld [vmem:[#allocation2] sm:$0xf]
        %v243 = vld [vmem:[#allocation2 + $0x4] sm:$0xf]
        %v246 = vunpack.c.l.b16 %v242
        %v247 = vunpack.c.l.b16 %v243
        %v248 = vpack.c.b16 %v247, %v246
        %vm249 = vcmask 130048
        %v251 = vsel %vm249, %v248, 0
        %253 = vmatprep.subr.bf16.mxu0 0
        %254 = vmatpush1.bf16.msra.mxu0 %v241
        %255 = vmatprep.subr.bf16.mxu0 0
        %256 = vmatpush1.bf16.msra.mxu0 0
        %257 = vmatprep.subr.bf16.mxu0 0
        %258 = vmatpush1.bf16.msra.mxu0 0
        %259 = vmatprep.subr.bf16.mxu0 0
        %260 = vmatpush1.bf16.msra.mxu0 0
        %261 = vmatprep.subr.bf16.mxu0 0
        %262 = vmatpush1.bf16.msra.mxu0 0
        %263 = vmatprep.subr.bf16.mxu0 0
        %264 = vmatpush1.bf16.msra.mxu0 0
        %265 = vmatprep.subr.bf16.mxu0 0
        %266 = vmatpush1.bf16.msra.mxu0 0
        %267 = vmatprep.subr.bf16.mxu0 0
        %268 = vmatpush1.bf16.msra.mxu0 0
        %269 = vmatprep.subr.bf16.mxu0 0
        %270 = vmatpush1.bf16.msra.mxu0 0
        %271 = vmatprep.subr.bf16.mxu0 0
        %272 = vmatpush1.bf16.msra.mxu0 0
        %273 = vmatprep.subr.bf16.mxu0 0
        %274 = vmatpush1.bf16.msra.mxu0 0
        %275 = vmatprep.subr.bf16.mxu0 0
        %276 = vmatpush1.bf16.msra.mxu0 0
        %277 = vmatprep.subr.bf16.mxu0 0
        %278 = vmatpush1.bf16.msra.mxu0 0
        %279 = vmatprep.subr.bf16.mxu0 0
        %280 = vmatpush1.bf16.msra.mxu0 0
        %281 = vmatprep.subr.bf16.mxu0 0
        %282 = vmatpush1.bf16.msra.mxu0 0
        %283 = vmatprep.subr.bf16.mxu0 0
        %284 = vmatpush1.bf16.msra.mxu0 0
        %285 = vmatprep.mubr.bf16.mxu0 0
        %286 = vmatmul.mubr.bf16.gmra.mrb[0].mxu0 %v251
        %v287 = vpop.f32.mrb[0].mxu0
        %v288 = vadd.f32 0.0, %v287
        %v289 = vpop.f32.mrb[0].mxu0
        %v290 = vpop.f32.mrb[0].mxu0
        %v291 = vadd.f32 0.0, %v290
        %v292 = vpop.f32.mrb[0].mxu0
        %293 = vdwg.mxu0
        %v294 = vpack.c.bf16 %v291, %v288
        %v295 = vld [vmem:[%s1] sm:$0xf]
        %v296 = vld [vmem:[%s1 + $0x4] sm:$0xf]
        %v299 = vunpack.c.l.b16 %v295
        %v300 = vunpack.c.l.b16 %v296
        %v301 = vpack.c.b16 %v300, %v299
        %v304 = vsel %vm249, %v294, 0
        %306 = vmatprep.subr.bf16.mxu0 0
        %307 = vmatpush1.bf16.msra.mxu0 %v301
        %308 = vmatprep.subr.bf16.mxu0 0
        %309 = vmatpush1.bf16.msra.mxu0 0
        %310 = vmatprep.subr.bf16.mxu0 0
        %311 = vmatpush1.bf16.msra.mxu0 0
        %312 = vmatprep.subr.bf16.mxu0 0
        %313 = vmatpush1.bf16.msra.mxu0 0
        %314 = vmatprep.subr.bf16.mxu0 0
        %315 = vmatpush1.bf16.msra.mxu0 0
        %316 = vmatprep.subr.bf16.mxu0 0
        %317 = vmatpush1.bf16.msra.mxu0 0
        %318 = vmatprep.subr.bf16.mxu0 0
        %319 = vmatpush1.bf16.msra.mxu0 0
        %320 = vmatprep.subr.bf16.mxu0 0
        %321 = vmatpush1.bf16.msra.mxu0 0
        %322 = vmatprep.subr.bf16.mxu0 0
        %323 = vmatpush1.bf16.msra.mxu0 0
        %324 = vmatprep.subr.bf16.mxu0 0
        %325 = vmatpush1.bf16.msra.mxu0 0
        %326 = vmatprep.subr.bf16.mxu0 0
        %327 = vmatpush1.bf16.msra.mxu0 0
        %328 = vmatprep.subr.bf16.mxu0 0
        %329 = vmatpush1.bf16.msra.mxu0 0
        %330 = vmatprep.subr.bf16.mxu0 0
        %331 = vmatpush1.bf16.msra.mxu0 0
        %332 = vmatprep.subr.bf16.mxu0 0
        %333 = vmatpush1.bf16.msra.mxu0 0
        %334 = vmatprep.subr.bf16.mxu0 0
        %335 = vmatpush1.bf16.msra.mxu0 0
        %336 = vmatprep.subr.bf16.mxu0 0
        %337 = vmatpush1.bf16.msra.mxu0 0
        %338 = vmatprep.mubr.bf16.mxu0 0
        %339 = vmatmul.mubr.bf16.gmra.mrb[0].mxu0 %v304
        %v340 = vpop.f32.mrb[0].mxu0
        %v341 = vadd.f32 0.0, %v340
        %v342 = vpop.f32.mrb[0].mxu0
        %v343 = vpop.f32.mrb[0].mxu0
        %v344 = vadd.f32 0.0, %v343
        %v345 = vpop.f32.mrb[0].mxu0
        %346 = vdwg.mxu0
        %347 = vst [vmem:[%s236] sm:$0xff] %v341
        %348 = vst [vmem:[%s236 + $0x8] sm:$0xff] %v344
        %s349 = smul.u32 2, %s23
        %p350 = scmp.lt.s32.totalorder %s22, 3
        %s351 = scalar_select %p350, %s22, 3
        %p352 = scmp.lt.s32.totalorder %s349, 1
        %s353 = scalar_select %p352, %s349, 1
        %s354 = smul.addr %s351, 2
        %s355 = sadd.s32 %s353, %s354
        %s356 = smul.addr %s355, 8
        %s357 = scalar_lea.vmem %s3, %s356
        // Predicated region
        $region41: #{fn.1} parent=31 // pred_check
          %p358 = pneg %p123
        $region42: #{fn.1} parent=31 // pred_check_branch
          %360 = sbr.rel (%p358) target = $region44
        $region43: #{fn.1} parent=31 // pred_region
          %s361 = smul.u32 2, %s23
        $region44: #{fn.1} parent=31 // pred_fallthru
          _
      $region32: #{fn.1} parent=5 // pred_fallthru
        _
      %p362 = scmp.le.s32.totalorder 2, %s13
      // Predicated region
      $region45: #{fn.1} parent=5 // pred_check
        %p363 = pneg %p362
      $region46: #{fn.1} parent=5 // pred_check_branch
        %365 = sbr.rel (%p363) target = $region48
      $region47: #{fn.1} parent=5 // pred_region
        %s366 = ssub.s32 %s13, 2
        // Predicated region
        $region49: #{fn.1} parent=47 // pred_check
          %p367 = pneg %p129
        $region50: #{fn.1} parent=47 // pred_check_branch
          %369 = sbr.rel (%p367) target = $region52
        $region51: #{fn.1} parent=47 // pred_region
          %s370 = smul.u32 2, %s25
          %p371 = scmp.lt.s32.totalorder %s24, 3
          %s372 = scalar_select %p371, %s24, 3
          %p373 = scmp.lt.s32.totalorder %s370, 1
          %s374 = scalar_select %p373, %s370, 1
          %s375 = smul.addr %s372, 2
          %s376 = sadd.s32 %s374, %s375
          %s377 = smul.addr %s376, 8
          %s378 = scalar_lea.vmem %s3, %s377
        $region52: #{fn.1} parent=47 // pred_fallthru
          _
      $region48: #{fn.1} parent=5 // pred_fallthru
        _
    $region6: #{fn.1} parent=1 // loop_footer
      %s17 = sadd.s32 1, %s13
    $region7: #{fn.1} parent=1 // loop_footer_branch
      %12 = sbr.rel target = $region3
    $region8: #{fn.1} parent=1 // loop_exit
      _
    %379 = vsyncpa [#allocation3], 1
    %s380 = scalar_lea.sflag [#allocation3], 1
    %381 = vsyncpa %s380, 1
    %382 = vsyncpa [#allocation5], 1
    %s383 = scalar_lea.sflag [#allocation5], 1
    %384 = vsyncpa %s383, 1

</llo_original>
